<compile_context>
chip_gen: v7x
topology: tpu7x:2x2x1
jax: 0.10.0
libtpu: 0.0.40
codegen_flags: <defaults>
</compile_context>

<pallas_src>
import functools

import jax
import jax.numpy as jnp
from jax import lax
from jax.experimental import pallas as pl
from jax.experimental.pallas import tpu as pltpu


def _mlp_kernel(x_ref, w1_ref, w2_ref, o_ref, *, matmul_dtype):
    # x_ref : (TB, D_in)  VMEM   batch tile
    # w1_ref: (H, D_in)   VMEM   torch layout (resident across the grid)
    # w2_ref: (1, H)      VMEM   torch layout (resident across the grid)
    # o_ref : (TB, 1)     VMEM
    x = x_ref[...]
    w1 = w1_ref[...]
    w2 = w2_ref[...]

    if matmul_dtype is not None:
        x = x.astype(matmul_dtype)
        w1 = w1.astype(matmul_dtype)

    # fc1: x @ w1^T on the MXU, contracting the last dim of both operands
    # (no wrapper-side transpose needed); accumulate in f32.
    h = lax.dot_general(
        x, w1,
        dimension_numbers=(((1,), (1,)), ((), ())),
        preferred_element_type=jnp.float32,
    )

    # Mish with a single EUP transcendental:
    #   mish(z) = z * t / (t + 2),  t = e^z (e^z + 2)
    # Clamp the exponent so exp never overflows; for z > 20 the factor is 1.0
    # to f32 precision, so mish(z) ~= z there.
    e = jnp.exp(jnp.minimum(h, 20.0))
    t = e * (e + 2.0)
    h = jnp.where(h > 20.0, h, h * (t / (t + 2.0)))

    # fc2 (output width 1): VPU multiply + lane reduction instead of a
    # nearly fully padded MXU pass.
    y = jnp.sum(h * w2.astype(jnp.float32), axis=-1, keepdims=True)
    o_ref[...] = y.astype(o_ref.dtype)


def _pick_batch_tile(B, cap=128):
    """Largest batch tile <= cap that evenly divides B (multiple of 8 when
    possible); falls back to a single full-array block otherwise."""
    if B <= cap:
        return B
    for tb in (cap, 64, 32, 16, 8):
        if B % tb == 0:
            return tb
    return B


def mlp_forward(x, w1, w2, *, block_b=128, matmul_dtype=None):
    """x: (B, D_in); w1: (H, D_in) torch layout; w2: (1, H) torch layout."""
    B, D_in = x.shape
    H = w1.shape[0]

    tb = _pick_batch_tile(B, cap=block_b)
    grid = (pl.cdiv(B, tb),)

    kernel = functools.partial(_mlp_kernel, matmul_dtype=matmul_dtype)

    return pl.pallas_call(
        kernel,
        out_shape=jax.ShapeDtypeStruct((B, 1), x.dtype),
        grid_spec=pltpu.PrefetchScalarGridSpec(
            num_scalar_prefetch=0,
            grid=grid,
            in_specs=[
                # batch tile of activations: streamed / pipelined over the grid
                pl.BlockSpec((tb, D_in), lambda i: (i, 0)),
                # weights: same block every step -> stay resident in VMEM
                pl.BlockSpec((H, D_in), lambda i: (0, 0)),
                pl.BlockSpec((1, H), lambda i: (0, 0)),
            ],
            out_specs=pl.BlockSpec((tb, 1), lambda i: (i, 0)),
        ),
        compiler_params=pltpu.CompilerParams(
            # batch tiles are independent -> megacore / dual-TC sharding on v7x
            dimension_semantics=("parallel",),
        ),
    )(x, w1, w2)


def mlp_reference(x, w1, w2):
    h = x @ w1.T
    h = h * jnp.tanh(jax.nn.softplus(h))
    return h @ w2.T


if __name__ == "__main__":
    key = jax.random.PRNGKey(0)
    k_x, k_w1, k_w2 = jax.random.split(key, 3)

    input_size = 32
    hidden_size = 32
    dtype = jnp.float32

    # Deterministic init mimicking torch.nn.Linear (uniform in +-1/sqrt(fan_in)).
    bound1 = 1.0 / (input_size ** 0.5)
    bound2 = 1.0 / (hidden_size ** 0.5)
    w1 = jax.random.uniform(k_w1, (hidden_size, input_size), dtype=dtype,
                            minval=-bound1, maxval=bound1)
    w2 = jax.random.uniform(k_w2, (1, hidden_size), dtype=dtype,
                            minval=-bound2, maxval=bound2)

    # Batch large enough to exercise a multi-step batch grid (2 tiles of 128).
    batch = 256
    x = jax.random.normal(k_x, (batch, input_size), dtype=dtype)

    out = jax.block_until_ready(mlp_forward(x, w1, w2))
    ref = mlp_reference(x, w1, w2)
    assert out.shape == (batch, 1)
    assert jnp.allclose(out, ref, atol=1e-5, rtol=1e-4), "f32 mismatch vs reference"

    # Tiny-batch path (single full block, like the original test shapes).
    x_small = x[:8]
    out_small = jax.block_until_ready(mlp_forward(x_small, w1, w2))
    assert out_small.shape == (8, 1)
    assert jnp.allclose(out_small, ref[:8], atol=1e-5, rtol=1e-4), \
        "small-batch mismatch vs reference"

    # Optional bf16 MXU operands with f32 accumulation (looser tolerance).
    out_bf16 = jax.block_until_ready(
        mlp_forward(x, w1, w2, matmul_dtype=jnp.bfloat16))
    assert jnp.allclose(out_bf16, ref, atol=5e-2, rtol=5e-2), \
        "bf16-matmul mismatch vs reference"

    print("KERNEL_OK")
</pallas_src>

<mosaic_0001>
module attributes {stable_mosaic.version = 11 : i64} {
  func.func @_mlp_kernel(%arg0: i32, %arg1: memref<128x32xf32, #tpu.memory_space<vmem>>, %arg2: memref<32x32xf32, #tpu.memory_space<vmem>>, %arg3: memref<1x32xf32, #tpu.memory_space<vmem>>, %arg4: memref<128x1xf32, #tpu.memory_space<vmem>>) attributes {dimension_semantics = [#tpu.dimension_semantics<parallel>], iteration_bounds = array<i64: 2>, scalar_prefetch = 0 : i64, scratch_operands = 0 : i64, tpu.core_type = #tpu.core_type<tc>, window_params = [{transform_indices = @transform_0, window_bounds = array<i64: 128, 32>}, {pipeline_mode = #tpu.pipeline_mode<synchronous>, transform_indices = @transform_1, window_bounds = array<i64: 32, 32>}, {pipeline_mode = #tpu.pipeline_mode<synchronous>, transform_indices = @transform_2, window_bounds = array<i64: 1, 32>}, {transform_indices = @transform_3, window_bounds = array<i64: 128, 1>}]} {
    %c0 = arith.constant 0 : index
    %c0_0 = arith.constant 0 : index
    %0 = vector.load %arg1[%c0, %c0_0] : memref<128x32xf32, #tpu.memory_space<vmem>>, vector<128x32xf32>
    %c0_1 = arith.constant 0 : index
    %c0_2 = arith.constant 0 : index
    %1 = vector.load %arg2[%c0_1, %c0_2] : memref<32x32xf32, #tpu.memory_space<vmem>>, vector<32x32xf32>
    %c0_3 = arith.constant 0 : index
    %c0_4 = arith.constant 0 : index
    %2 = vector.load %arg3[%c0_3, %c0_4] : memref<1x32xf32, #tpu.memory_space<vmem>>, vector<1x32xf32>
    %cst = arith.constant dense<0.000000e+00> : vector<128x32xf32>
    %3 = tpu.matmul %0, %1, %cst {dimension_numbers = #tpu.dot_dimension_numbers<[1], [1], [0], [0], [0, 0, 1, 0], [], []>} : vector<128x32xf32>, vector<32x32xf32>, vector<128x32xf32> -> vector<128x32xf32>
    %cst_5 = arith.constant 2.000000e+01 : f32
    %4 = vector.broadcast %cst_5 : f32 to vector<128x32xf32>
    %5 = arith.minimumf %3, %4 : vector<128x32xf32>
    %6 = math.exp %5 : vector<128x32xf32>
    %cst_6 = arith.constant 2.000000e+00 : f32
    %7 = vector.broadcast %cst_6 : f32 to vector<128x32xf32>
    %8 = arith.addf %6, %7 : vector<128x32xf32>
    %9 = arith.mulf %6, %8 : vector<128x32xf32>
    %cst_7 = arith.constant 2.000000e+01 : f32
    %10 = vector.broadcast %cst_7 : f32 to vector<128x32xf32>
    %11 = arith.cmpf ogt, %3, %10 : vector<128x32xf32>
    %cst_8 = arith.constant 2.000000e+00 : f32
    %12 = vector.broadcast %cst_8 : f32 to vector<128x32xf32>
    %13 = arith.addf %9, %12 : vector<128x32xf32>
    %14 = arith.divf %9, %13 : vector<128x32xf32>
    %15 = arith.mulf %3, %14 : vector<128x32xf32>
    %16 = arith.select %11, %3, %15 : vector<128x32xi1>, vector<128x32xf32>
    %17 = vector.broadcast %2 : vector<1x32xf32> to vector<128x32xf32>
    %18 = arith.mulf %16, %17 : vector<128x32xf32>
    %cst_9 = arith.constant dense<0.000000e+00> : vector<128xf32>
    %19 = vector.multi_reduction <add>, %18, %cst_9 [1] : vector<128x32xf32> to vector<128xf32>
    %20 = vector.shape_cast %19 : vector<128xf32> to vector<128x1xf32>
    %c0_10 = arith.constant 0 : index
    %c0_11 = arith.constant 0 : index
    %21 = vector.load %arg4[%c0_10, %c0_11] : memref<128x1xf32, #tpu.memory_space<vmem>>, vector<128x1xf32>
    tpu.vector_store %arg4[%c0_10, %c0_11], %20 {strides = array<i32>} : memref<128x1xf32, #tpu.memory_space<vmem>>, vector<128x1xf32>,
    return
  }
  func.func @transform_0(%arg0: i32) -> (i32, i32) {
    %c0_i32 = arith.constant 0 : i32
    %c0_i32_0 = arith.constant 0 : i32
    return %arg0, %c0_i32 : i32, i32
  }
  func.func @transform_1(%arg0: i32) -> (i32, i32) {
    %c0_i32 = arith.constant 0 : i32
    %c0_i32_0 = arith.constant 0 : i32
    %c0_i32_1 = arith.constant 0 : i32
    return %c0_i32, %c0_i32_0 : i32, i32
  }
  func.func @transform_2(%arg0: i32) -> (i32, i32) {
    %c0_i32 = arith.constant 0 : i32
    %c0_i32_0 = arith.constant 0 : i32
    %c0_i32_1 = arith.constant 0 : i32
    return %c0_i32, %c0_i32_0 : i32, i32
  }
  func.func @transform_3(%arg0: i32) -> (i32, i32) {
    %c0_i32 = arith.constant 0 : i32
    %c0_i32_0 = arith.constant 0 : i32
    return %arg0, %c0_i32 : i32, i32
  }
}

</mosaic_0001>

<llo_original>
// kernel: tpu_custom_call.1
$region0: #{tpu_custom_call.1}
  #allocation0 [shape = 'u32[]', space=smem, size = 0x4, offset = 0x4, fixed_abs, tag = 'smem constant byte address 0x4 - core index']
  #allocation1 [shape = 'u32[144,128]{1,0:T(1,128)}', space=vmem, size = 0x12000, scoped, tag = 'internal scratch']
  %s0 = inlined_call_operand.vmem [shape: f32[256,32], index: 0, kind: input, shape index: {}]
  %s1 = inlined_call_operand.vmem [shape: f32[32,32], index: 1, kind: input, shape index: {}]
  %s2 = inlined_call_operand.vmem [shape: f32[1,32], index: 2, kind: input, shape index: {}]
  %s3 = inlined_call_operand.vmem [shape: f32[256,1], index: 3, kind: output, shape index: {}]
  %s4 = sld [smem:[#allocation0]]
  $region45: #{tpu_custom_call.1} parent=0
    _
  %s6 = ssub.s32 1, %s4
  %s7 = scalar_select 0, %s6, %s4
  loop: start=0, step=1, limit=4
  $region2: #{tpu_custom_call.1} parent=0 // loop_pre_header
    _
  $region3: #{tpu_custom_call.1} parent=0 // loop_header
    %s9 = sphi 0, %s13
    %p10 = scmp.ge.s32.totalorder %s9, 4
    %s19 = sphi 0, %s21
    %s22 = sphi 0, %s19
    %s23 = sphi 0, %s22
    %s39 = sphi 0, %s23
    %s43 = sphi 0, %s43
    %s45 = sphi 0, %s43
    %s46 = sphi 0, %s45
    %s60 = sphi 0, %s46
    %s64 = sphi 0, %s64
    %s66 = sphi 0, %s64
    %s67 = sphi 0, %s66
    %s81 = sphi 0, %s67
    %s87 = sphi 0, %s89
    %s90 = sphi 0, %s87
    %s91 = sphi 0, %s90
    %s107 = sphi 0, %s91
  $region4: #{tpu_custom_call.1} parent=0 // loop_header_branch
    %12 = sbr.rel (%p10) target = $region8
  $region5: #{tpu_custom_call.1} parent=0 // loop_body
    %s14 = ssub.s32 %s9, 1
    %s15 = ssub.s32 %s9, 2
    %s16 = sadd.s32 %s9, 1
    %s17 = ssub.s32 %s9, %s16
    %p18 = scmp.eq.s32.totalorder %s17, 0
    %s20 = sadd.s32 %s19, 1
    %s21 = scalar_select %p18, %s19, %s20
    %p24 = pneg %p18
    %p25 = scmp.eq.s32.totalorder %s9, 1
    %p26 = por %p24, %p25
    %p27 = scmp.ne.s32.totalorder %s19, %s22
    %p28 = scmp.eq.s32.totalorder %s9, 0
    %p29 = por %p27, %p28
    %p30 = scmp.ne.s32.totalorder %s19, %s22
    %p31 = scmp.eq.s32.totalorder %s14, 1
    %p32 = por %p30, %p31
    %p33 = scmp.ne.s32.totalorder %s22, %s23
    %p34 = scmp.eq.s32.totalorder %s14, 0
    %p35 = por %p33, %p34
    %p36 = scmp.ne.s32.totalorder %s22, %s23
    %p37 = scmp.eq.s32.totalorder %s15, 1
    %p38 = por %p36, %p37
    %p40 = scmp.ne.s32.totalorder %s23, %s39
    %p41 = scmp.eq.s32.totalorder %s15, 0
    %p42 = por %p40, %p41
    %s44 = sadd.s32 %s43, 1
    %p47 = scmp.eq.s32.totalorder %s9, 1
    %p48 = scmp.ne.s32.totalorder %s43, %s45
    %p49 = scmp.eq.s32.totalorder %s9, 0
    %p50 = por %p48, %p49
    %p51 = scmp.ne.s32.totalorder %s43, %s45
    %p52 = scmp.eq.s32.totalorder %s14, 1
    %p53 = por %p51, %p52
    %p54 = scmp.ne.s32.totalorder %s45, %s46
    %p55 = scmp.eq.s32.totalorder %s14, 0
    %p56 = por %p54, %p55
    %p57 = scmp.ne.s32.totalorder %s45, %s46
    %p58 = scmp.eq.s32.totalorder %s15, 1
    %p59 = por %p57, %p58
    %p61 = scmp.ne.s32.totalorder %s46, %s60
    %p62 = scmp.eq.s32.totalorder %s15, 0
    %p63 = por %p61, %p62
    %s65 = sadd.s32 %s64, 1
    %p68 = scmp.eq.s32.totalorder %s9, 1
    %p69 = scmp.ne.s32.totalorder %s64, %s66
    %p70 = scmp.eq.s32.totalorder %s9, 0
    %p71 = por %p69, %p70
    %p72 = scmp.ne.s32.totalorder %s64, %s66
    %p73 = scmp.eq.s32.totalorder %s14, 1
    %p74 = por %p72, %p73
    %p75 = scmp.ne.s32.totalorder %s66, %s67
    %p76 = scmp.eq.s32.totalorder %s14, 0
    %p77 = por %p75, %p76
    %p78 = scmp.ne.s32.totalorder %s66, %s67
    %p79 = scmp.eq.s32.totalorder %s15, 1
    %p80 = por %p78, %p79
    %p82 = scmp.ne.s32.totalorder %s67, %s81
    %p83 = scmp.eq.s32.totalorder %s15, 0
    %p84 = por %p82, %p83
    %s85 = ssub.s32 %s9, %s16
    %p86 = scmp.eq.s32.totalorder %s85, 0
    %s88 = sadd.s32 %s87, 1
    %s89 = scalar_select %p86, %s87, %s88
    %p92 = pneg %p86
    %p93 = scmp.eq.s32.totalorder %s9, 1
    %p94 = por %p92, %p93
    %p95 = scmp.ne.s32.totalorder %s87, %s90
    %p96 = scmp.eq.s32.totalorder %s9, 0
    %p97 = por %p95, %p96
    %p98 = scmp.ne.s32.totalorder %s87, %s90
    %p99 = scmp.eq.s32.totalorder %s14, 1
    %p100 = por %p98, %p99
    %p101 = scmp.ne.s32.totalorder %s90, %s91
    %p102 = scmp.eq.s32.totalorder %s14, 0
    %p103 = por %p101, %p102
    %p104 = scmp.ne.s32.totalorder %s90, %s91
    %p105 = scmp.eq.s32.totalorder %s15, 1
    %p106 = por %p104, %p105
    %p108 = scmp.ne.s32.totalorder %s91, %s107
    %p109 = scmp.eq.s32.totalorder %s15, 0
    %p110 = por %p108, %p109
    %p111 = scmp.le.s32.totalorder 1, %s9
    %p112 = scmp.lt.s32.totalorder %s9, 3
    %p113 = pnand %p111, %p112
    %p114 = pneg %p113
    // Predicated region
    $region9: #{tpu_custom_call.1} parent=5 // pred_check
      _
    $region10: #{tpu_custom_call.1} parent=5 // pred_check_branch
      %116 = sbr.rel (%p113) target = $region12
    $region11: #{tpu_custom_call.1} parent=5 // pred_region
      %s117 = ssub.s32 %s9, 1
      // Predicated region
      $region13: #{tpu_custom_call.1} parent=11 // pred_check
        %p118 = pneg %p56
      $region14: #{tpu_custom_call.1} parent=11 // pred_check_branch
        %120 = sbr.rel (%p118) target = $region16
      $region15: #{tpu_custom_call.1} parent=11 // pred_region
        _
      $region16: #{tpu_custom_call.1} parent=11 // pred_fallthru
        _
      // Predicated region
      $region17: #{tpu_custom_call.1} parent=11 // pred_check
        %p121 = pneg %p77
      $region18: #{tpu_custom_call.1} parent=11 // pred_check_branch
        %123 = sbr.rel (%p121) target = $region20
      $region19: #{tpu_custom_call.1} parent=11 // pred_region
        _
      $region20: #{tpu_custom_call.1} parent=11 // pred_fallthru
        _
    $region12: #{tpu_custom_call.1} parent=5 // pred_fallthru
      _
    %p124 = scmp.lt.s32.totalorder %s9, 2
    // Predicated region
    $region21: #{tpu_custom_call.1} parent=5 // pred_check
      %p125 = pneg %p124
    $region22: #{tpu_custom_call.1} parent=5 // pred_check_branch
      %127 = sbr.rel (%p125) target = $region24
    $region23: #{tpu_custom_call.1} parent=5 // pred_region
      // Predicated region
      $region25: #{tpu_custom_call.1} parent=23 // pred_check
        %p128 = pneg %p29
      $region26: #{tpu_custom_call.1} parent=23 // pred_check_branch
        %130 = sbr.rel (%p128) target = $region28
      $region27: #{tpu_custom_call.1} parent=23 // pred_region
        %s131 = smul.u32 16, %s9
        %p132 = scmp.lt.s32.totalorder %s131, 31
        %s133 = scalar_select %p132, %s131, 31
        %s134 = smul.addr %s133, 8
        %s135 = scalar_lea.vmem %s0, %s134
        %s136 = smul.u32 16, %s9
      $region28: #{tpu_custom_call.1} parent=23 // pred_fallthru
        _
    $region24: #{tpu_custom_call.1} parent=5 // pred_fallthru
      _
    %p137 = scmp.le.s32.totalorder 1, %s9
    %p138 = scmp.lt.s32.totalorder %s9, 3
    %p139 = pnand %p137, %p138
    %p140 = pneg %p139
    // Predicated region
    $region29: #{tpu_custom_call.1} parent=5 // pred_check
      _
    $region30: #{tpu_custom_call.1} parent=5 // pred_check_branch
      %142 = sbr.rel (%p139) target = $region32
    $region31: #{tpu_custom_call.1} parent=5 // pred_region
      %s143 = ssub.s32 %s9, 1
      %s144 = smul.u32 16, %s14
      %p145 = scmp.lt.s32.totalorder %s144, 31
      %s146 = scalar_select %p145, %s144, 31
      %s147 = smul.addr %s146, 8
      %s148 = scalar_lea.vmem %s0, %s147
      %p149 = pneg %p35
      %p150 = pneg %p32
      %p151 = pneg %p56
      %p152 = pneg %p53
      %p153 = pneg %p77
      %p154 = pneg %p74
      %p155 = pneg %p103
      %p156 = pneg %p100
      %s157 = smul.u32 16, %s14
      %p158 = scmp.lt.s32.totalorder %s157, 31
      %s159 = scalar_select %p158, %s157, 31
      %s160 = smul.addr %s159, 8
      %s161 = scalar_lea.vmem %s3, %s160
      %s162 = smul.u32 16, %s14
      %p163 = scmp.lt.s32.totalorder %s162, 31
      %s164 = scalar_select %p163, %s162, 31
      %s165 = smul.addr %s164, 8
      %s166 = scalar_lea.vmem %s0, %s165
      %s167 = smul.u32 16, %s14
      %s168 = smul.u32 16, %s14
      %p169 = scmp.lt.s32.totalorder %s168, 31
      %s170 = scalar_select %p169, %s168, 31
      %s171 = smul.addr %s170, 8
      %s172 = scalar_lea.vmem %s3, %s171
      %s173 = smul.u32 16, %s14
      %v174 = vld [vmem:[%s166] sm:$0xff]
      %v175 = vld [vmem:[%s166 + $0x8] sm:$0xff]
      %v176 = vld [vmem:[%s166 + $0x10] sm:$0xff]
      %v177 = vld [vmem:[%s166 + $0x18] sm:$0xff]
      %v178 = vld [vmem:[%s166 + $0x20] sm:$0xff]
      %v179 = vld [vmem:[%s166 + $0x28] sm:$0xff]
      %v180 = vld [vmem:[%s166 + $0x30] sm:$0xff]
      %v181 = vld [vmem:[%s166 + $0x38] sm:$0xff]
      %v182 = vld [vmem:[%s166 + $0x40] sm:$0xff]
      %v183 = vld [vmem:[%s166 + $0x48] sm:$0xff]
      %v184 = vld [vmem:[%s166 + $0x50] sm:$0xff]
      %v185 = vld [vmem:[%s166 + $0x58] sm:$0xff]
      %v186 = vld [vmem:[%s166 + $0x60] sm:$0xff]
      %v187 = vld [vmem:[%s166 + $0x68] sm:$0xff]
      %v188 = vld [vmem:[%s166 + $0x70] sm:$0xff]
      %v189 = vld [vmem:[%s166 + $0x78] sm:$0xff]
      %v190 = vld [vmem:[%s1] sm:$0xff]
      %v191 = vld [vmem:[%s1 + $0x8] sm:$0xff]
      %v192 = vld [vmem:[%s1 + $0x10] sm:$0xff]
      %v193 = vld [vmem:[%s1 + $0x18] sm:$0xff]
      %v194 = vld [vmem:[%s2] sm:$0x1]
      %vm195 = vcmask 261120
      %v197 = vsel %vm195, %v174, 0
      %v200 = vsel %vm195, %v175, 0
      %v203 = vsel %vm195, %v176, 0
      %v206 = vsel %vm195, %v177, 0
      %v209 = vsel %vm195, %v178, 0
      %v212 = vsel %vm195, %v179, 0
      %v215 = vsel %vm195, %v180, 0
      %v218 = vsel %vm195, %v181, 0
      %v221 = vsel %vm195, %v182, 0
      %v224 = vsel %vm195, %v183, 0
      %v227 = vsel %vm195, %v184, 0
      %v230 = vsel %vm195, %v185, 0
      %v233 = vsel %vm195, %v186, 0
      %v236 = vsel %vm195, %v187, 0
      %v239 = vsel %vm195, %v188, 0
      %v242 = vsel %vm195, %v189, 0
      %v245 = vsel %vm195, %v190, 0
      %v248 = vsel %vm195, %v191, 0
      %v251 = vsel %vm195, %v192, 0
      %v254 = vsel %vm195, %v193, 0
      %256 = vmatprep.subr.mxu0 0.0
      %257 = vmatpush1.xpose.msra.mxu0 %v245
      %258 = vmatprep.subr.mxu0 0.0
      %259 = vmatpush1.xpose.msra.mxu0 %v248
      %260 = vmatprep.subr.mxu0 0.0
      %261 = vmatpush1.xpose.msra.mxu0 %v251
      %262 = vmatprep.subr.mxu0 0.0
      %263 = vmatpush1.xpose.msra.mxu0 %v254
      %264 = vmatprep.subr.mxu0 0.0
      %265 = vmatpush1.xpose.msra.mxu0 0.0
      %266 = vmatprep.subr.mxu0 0.0
      %267 = vmatpush1.xpose.msra.mxu0 0.0
      %268 = vmatprep.subr.mxu0 0.0
      %269 = vmatpush1.xpose.msra.mxu0 0.0
      %270 = vmatprep.subr.mxu0 0.0
      %271 = vmatpush1.xpose.msra.mxu0 0.0
      %272 = vmatprep.subr.mxu0 0.0
      %273 = vmatpush1.xpose.msra.mxu0 0.0
      %274 = vmatprep.subr.mxu0 0.0
      %275 = vmatpush1.xpose.msra.mxu0 0.0
      %276 = vmatprep.subr.mxu0 0.0
      %277 = vmatpush1.xpose.msra.mxu0 0.0
      %278 = vmatprep.subr.mxu0 0.0
      %279 = vmatpush1.xpose.msra.mxu0 0.0
      %280 = vmatprep.subr.mxu0 0.0
      %281 = vmatpush1.xpose.msra.mxu0 0.0
      %282 = vmatprep.subr.mxu0 0.0
      %283 = vmatpush1.xpose.msra.mxu0 0.0
      %284 = vmatprep.subr.mxu0 0.0
      %285 = vmatpush1.xpose.msra.mxu0 0.0
      %286 = vmatprep.subr.mxu0 0.0
      %287 = vmatpush1.xpose.msra.mxu0 0.0
      %288 = vmatprep.subr.mxu0 0.0
      %289 = vmatpush1.xpose.msra.mxu0 0.0
      %290 = vmatprep.subr.mxu0 0.0
      %291 = vmatpush1.xpose.msra.mxu0 0.0
      %292 = vmatprep.subr.mxu0 0.0
      %293 = vmatpush1.xpose.msra.mxu0 0.0
      %294 = vmatprep.subr.mxu0 0.0
      %295 = vmatpush1.xpose.msra.mxu0 0.0
      %296 = vmatprep.subr.mxu0 0.0
      %297 = vmatpush1.xpose.msra.mxu0 0.0
      %298 = vmatprep.subr.mxu0 0.0
      %299 = vmatpush1.xpose.msra.mxu0 0.0
      %300 = vmatprep.subr.mxu0 0.0
      %301 = vmatpush1.xpose.msra.mxu0 0.0
      %302 = vmatprep.subr.mxu0 0.0
      %303 = vmatpush1.xpose.msra.mxu0 0.0
      %304 = vmatprep.subr.mxu0 0.0
      %305 = vmatpush1.xpose.msra.mxu0 0.0
      %306 = vmatprep.subr.mxu0 0.0
      %307 = vmatpush1.xpose.msra.mxu0 0.0
      %308 = vmatprep.subr.mxu0 0.0
      %309 = vmatpush1.xpose.msra.mxu0 0.0
      %310 = vmatprep.subr.mxu0 0.0
      %311 = vmatpush1.xpose.msra.mxu0 0.0
      %312 = vmatprep.subr.mxu0 0.0
      %313 = vmatpush1.xpose.msra.mxu0 0.0
      %314 = vmatprep.subr.mxu0 0.0
      %315 = vmatpush1.xpose.msra.mxu0 0.0
      %316 = vmatprep.subr.mxu0 0.0
      %317 = vmatpush1.xpose.msra.mxu0 0.0
      %318 = vmatprep.subr.mxu0 0.0
      %319 = vmatpush1.xpose.msra.mxu0 0.0
      %320 = vmatprep.mubr.f32.mxu0 0.0
      %321 = vmatmul.mubr.f32.gmra.mrb[0].mxu0 %v197
      %v322 = vpop.f32.mrb[0].mxu0
      %v323 = vadd.f32 0.0, %v322
      %v324 = vpop.f32.mrb[0].mxu0
      %325 = vmatprep.mubr.f32.mxu0 0.0
      %326 = vmatmul.mubr.f32.gmra.mrb[0].mxu0 %v200
      %v327 = vpop.f32.mrb[0].mxu0
      %v328 = vadd.f32 0.0, %v327
      %v329 = vpop.f32.mrb[0].mxu0
      %330 = vmatprep.mubr.f32.mxu0 0.0
      %331 = vmatmul.mubr.f32.gmra.mrb[0].mxu0 %v203
      %v332 = vpop.f32.mrb[0].mxu0
      %v333 = vadd.f32 0.0, %v332
      %v334 = vpop.f32.mrb[0].mxu0
      %335 = vmatprep.mubr.f32.mxu0 0.0
      %336 = vmatmul.mubr.f32.gmra.mrb[0].mxu0 %v206
      %v337 = vpop.f32.mrb[0].mxu0
      %v338 = vadd.f32 0.0, %v337
      %v339 = vpop.f32.mrb[0].mxu0
      %340 = vmatprep.mubr.f32.mxu0 0.0
      %341 = vmatmul.mubr.f32.gmra.mrb[0].mxu0 %v209
      %v342 = vpop.f32.mrb[0].mxu0
      %v343 = vadd.f32 0.0, %v342
      %v344 = vpop.f32.mrb[0].mxu0
      %345 = vmatprep.mubr.f32.mxu0 0.0
      %346 = vmatmul.mubr.f32.gmra.mrb[0].mxu0 %v212
      %v347 = vpop.f32.mrb[0].mxu0
      %v348 = vadd.f32 0.0, %v347
      %v349 = vpop.f32.mrb[0].mxu0
      %350 = vmatprep.mubr.f32.mxu0 0.0
      %351 = vmatmul.mubr.f32.gmra.mrb[0].mxu0 %v215
      %v352 = vpop.f32.mrb[0].mxu0
      %v353 = vadd.f32 0.0, %v352
      %v354 = vpop.f32.mrb[0].mxu0
      %355 = vmatprep.mubr.f32.mxu0 0.0
      %356 = vmatmul.mubr.f32.gmra.mrb[0].mxu0 %v218
      %v357 = vpop.f32.mrb[0].mxu0
      %v358 = vadd.f32 0.0, %v357
      %v359 = vpop.f32.mrb[0].mxu0
      %360 = vmatprep.mubr.f32.mxu0 0.0
      %361 = vmatmul.mubr.f32.gmra.mrb[0].mxu0 %v221
      %v362 = vpop.f32.mrb[0].mxu0
      %v363 = vadd.f32 0.0, %v362
      %v364 = vpop.f32.mrb[0].mxu0
      %365 = vmatprep.mubr.f32.mxu0 0.0
      %366 = vmatmul.mubr.f32.gmra.mrb[0].mxu0 %v224
      %v367 = vpop.f32.mrb[0].mxu0
      %v368 = vadd.f32 0.0, %v367
      %v369 = vpop.f32.mrb[0].mxu0
      %370 = vmatprep.mubr.f32.mxu0 0.0
      %371 = vmatmul.mubr.f32.gmra.mrb[0].mxu0 %v227
      %v372 = vpop.f32.mrb[0].mxu0
      %v373 = vadd.f32 0.0, %v372
      %v374 = vpop.f32.mrb[0].mxu0
      %375 = vmatprep.mubr.f32.mxu0 0.0
      %376 = vmatmul.mubr.f32.gmra.mrb[0].mxu0 %v230
      %v377 = vpop.f32.mrb[0].mxu0
      %v378 = vadd.f32 0.0, %v377
      %v379 = vpop.f32.mrb[0].mxu0
      %380 = vmatprep.mubr.f32.mxu0 0.0
      %381 = vmatmul.mubr.f32.gmra.mrb[0].mxu0 %v233
      %v382 = vpop.f32.mrb[0].mxu0
      %v383 = vadd.f32 0.0, %v382
      %v384 = vpop.f32.mrb[0].mxu0
      %385 = vmatprep.mubr.f32.mxu0 0.0
      %386 = vmatmul.mubr.f32.gmra.mrb[0].mxu0 %v236
      %v387 = vpop.f32.mrb[0].mxu0
      %v388 = vadd.f32 0.0, %v387
      %v389 = vpop.f32.mrb[0].mxu0
      %390 = vmatprep.mubr.f32.mxu0 0.0
      %391 = vmatmul.mubr.f32.gmra.mrb[0].mxu0 %v239
      %v392 = vpop.f32.mrb[0].mxu0
      %v393 = vadd.f32 0.0, %v392
      %v394 = vpop.f32.mrb[0].mxu0
      %395 = vmatprep.mubr.f32.mxu0 0.0
      %396 = vmatmul.mubr.f32.gmra.mrb[0].mxu0 %v242
      %v397 = vpop.f32.mrb[0].mxu0
      %v398 = vadd.f32 0.0, %v397
      %v399 = vpop.f32.mrb[0].mxu0
      %400 = vdwg.mxu0
      %v401 = vmin.f32 %v323, 20.0
      %v402 = vmin.f32 %v328, 20.0
      %v403 = vmin.f32 %v333, 20.0
      %v404 = vmin.f32 %v338, 20.0
      %v405 = vmin.f32 %v343, 20.0
      %v406 = vmin.f32 %v348, 20.0
      %v407 = vmin.f32 %v353, 20.0
      %v408 = vmin.f32 %v358, 20.0
      %v409 = vmin.f32 %v363, 20.0
      %v410 = vmin.f32 %v368, 20.0
      %v411 = vmin.f32 %v373, 20.0
      %v412 = vmin.f32 %v378, 20.0
      %v413 = vmin.f32 %v383, 20.0
      %v414 = vmin.f32 %v388, 20.0
      %v415 = vmin.f32 %v393, 20.0
      %v416 = vmin.f32 %v398, 20.0
      %v417 = vmul.f32 %v401, 1.442695
      %v418 = vpow.pop %v417
      %v419 = vmul.f32 %v402, 1.442695
      %v420 = vpow.pop %v419
      %v421 = vmul.f32 %v403, 1.442695
      %v422 = vpow.pop %v421
      %v423 = vmul.f32 %v404, 1.442695
      %v424 = vpow.pop %v423
      %v425 = vmul.f32 %v405, 1.442695
      %v426 = vpow.pop %v425
      %v427 = vmul.f32 %v406, 1.442695
      %v428 = vpow.pop %v427
      %v429 = vmul.f32 %v407, 1.442695
      %v430 = vpow.pop %v429
      %v431 = vmul.f32 %v408, 1.442695
      %v432 = vpow.pop %v431
      %v433 = vmul.f32 %v409, 1.442695
      %v434 = vpow.pop %v433
      %v435 = vmul.f32 %v410, 1.442695
      %v436 = vpow.pop %v435
      %v437 = vmul.f32 %v411, 1.442695
      %v438 = vpow.pop %v437
      %v439 = vmul.f32 %v412, 1.442695
      %v440 = vpow.pop %v439
      %v441 = vmul.f32 %v413, 1.442695
      %v442 = vpow.pop %v441
      %v443 = vmul.f32 %v414, 1.442695
      %v444 = vpow.pop %v443
      %v445 = vmul.f32 %v415, 1.442695
      %v446 = vpow.pop %v445
      %v447 = vmul.f32 %v416, 1.442695
      %v448 = vpow.pop %v447
      %v449 = vadd.f32 %v418, 2.0
      %v450 = vadd.f32 %v420, 2.0
      %v451 = vadd.f32 %v422, 2.0
      %v452 = vadd.f32 %v424, 2.0
      %v453 = vadd.f32 %v426, 2.0
      %v454 = vadd.f32 %v428, 2.0
      %v455 = vadd.f32 %v430, 2.0
      %v456 = vadd.f32 %v432, 2.0
      %v457 = vadd.f32 %v434, 2.0
      %v458 = vadd.f32 %v436, 2.0
      %v459 = vadd.f32 %v438, 2.0
      %v460 = vadd.f32 %v440, 2.0
      %v461 = vadd.f32 %v442, 2.0
      %v462 = vadd.f32 %v444, 2.0
      %v463 = vadd.f32 %v446, 2.0
      %v464 = vadd.f32 %v448, 2.0
      %v465 = vmul.f32 %v418, %v449
      %v466 = vmul.f32 %v420, %v450
      %v467 = vmul.f32 %v422, %v451
      %v468 = vmul.f32 %v424, %v452
      %v469 = vmul.f32 %v426, %v453
      %v470 = vmul.f32 %v428, %v454
      %v471 = vmul.f32 %v430, %v455
      %v472 = vmul.f32 %v432, %v456
      %v473 = vmul.f32 %v434, %v457
      %v474 = vmul.f32 %v436, %v458
      %v475 = vmul.f32 %v438, %v459
      %v476 = vmul.f32 %v440, %v460
      %v477 = vmul.f32 %v442, %v461
      %v478 = vmul.f32 %v444, %v462
      %v479 = vmul.f32 %v446, %v463
      %v480 = vmul.f32 %v448, %v464
      %vm481 = vcmp.gt.f32.partialorder %v323, 20.0
      %vm482 = vcmp.gt.f32.partialorder %v328, 20.0
      %vm483 = vcmp.gt.f32.partialorder %v333, 20.0
      %vm484 = vcmp.gt.f32.partialorder %v338, 20.0
      %vm485 = vcmp.gt.f32.partialorder %v343, 20.0
      %vm486 = vcmp.gt.f32.partialorder %v348, 20.0
      %vm487 = vcmp.gt.f32.partialorder %v353, 20.0
      %vm488 = vcmp.gt.f32.partialorder %v358, 20.0
      %vm489 = vcmp.gt.f32.partialorder %v363, 20.0
      %vm490 = vcmp.gt.f32.partialorder %v368, 20.0
      %vm491 = vcmp.gt.f32.partialorder %v373, 20.0
      %vm492 = vcmp.gt.f32.partialorder %v378, 20.0
      %vm493 = vcmp.gt.f32.partialorder %v383, 20.0
      %vm494 = vcmp.gt.f32.partialorder %v388, 20.0
      %vm495 = vcmp.gt.f32.partialorder %v393, 20.0
      %vm496 = vcmp.gt.f32.partialorder %v398, 20.0
      %v497 = vadd.f32 %v465, 2.0
      %v498 = vadd.f32 %v466, 2.0
      %v499 = vadd.f32 %v467, 2.0
      %v500 = vadd.f32 %v468, 2.0
      %v501 = vadd.f32 %v469, 2.0
      %v502 = vadd.f32 %v470, 2.0
      %v503 = vadd.f32 %v471, 2.0
      %v504 = vadd.f32 %v472, 2.0
      %v505 = vadd.f32 %v473, 2.0
      %v506 = vadd.f32 %v474, 2.0
      %v507 = vadd.f32 %v475, 2.0
      %v508 = vadd.f32 %v476, 2.0
      %v509 = vadd.f32 %v477, 2.0
      %v510 = vadd.f32 %v478, 2.0
      %v511 = vadd.f32 %v479, 2.0
      %v512 = vadd.f32 %v480, 2.0
      %v513 = vrcp.pop %v497
      %v514 = vmul.f32 %v465, %v513
      %v515 = vrcp.pop %v498
      %v516 = vmul.f32 %v466, %v515
      %v517 = vrcp.pop %v499
      %v518 = vmul.f32 %v467, %v517
      %v519 = vrcp.pop %v500
      %v520 = vmul.f32 %v468, %v519
      %v521 = vrcp.pop %v501
      %v522 = vmul.f32 %v469, %v521
      %v523 = vrcp.pop %v502
      %v524 = vmul.f32 %v470, %v523
      %v525 = vrcp.pop %v503
      %v526 = vmul.f32 %v471, %v525
      %v527 = vrcp.pop %v504
      %v528 = vmul.f32 %v472, %v527
      %v529 = vrcp.pop %v505
      %v530 = vmul.f32 %v473, %v529
      %v531 = vrcp.pop %v506
      %v532 = vmul.f32 %v474, %v531
      %v533 = vrcp.pop %v507
      %v534 = vmul.f32 %v475, %v533
      %v535 = vrcp.pop %v508
      %v536 = vmul.f32 %v476, %v535
      %v537 = vrcp.pop %v509
      %v538 = vmul.f32 %v477, %v537
      %v539 = vrcp.pop %v510
      %v540 = vmul.f32 %v478, %v539
      %v541 = vrcp.pop %v511
      %v542 = vmul.f32 %v479, %v541
      %v543 = vrcp.pop %v512
      %v544 = vmul.f32 %v480, %v543
      %v545 = vmul.f32 %v323, %v514
      %v546 = vmul.f32 %v328, %v516
      %v547 = vmul.f32 %v333, %v518
      %v548 = vmul.f32 %v338, %v520
      %v549 = vmul.f32 %v343, %v522
      %v550 = vmul.f32 %v348, %v524
      %v551 = vmul.f32 %v353, %v526
      %v552 = vmul.f32 %v358, %v528
      %v553 = vmul.f32 %v363, %v530
      %v554 = vmul.f32 %v368, %v532
      %v555 = vmul.f32 %v373, %v534
      %v556 = vmul.f32 %v378, %v536
      %v557 = vmul.f32 %v383, %v538
      %v558 = vmul.f32 %v388, %v540
      %v559 = vmul.f32 %v393, %v542
      %v560 = vmul.f32 %v398, %v544
      %v561 = vsel %vm481, %v323, %v545
      %v562 = vsel %vm482, %v328, %v546
      %v563 = vsel %vm483, %v333, %v547
      %v564 = vsel %vm484, %v338, %v548
      %v565 = vsel %vm485, %v343, %v549
      %v566 = vsel %vm486, %v348, %v550
      %v567 = vsel %vm487, %v353, %v551
      %v568 = vsel %vm488, %v358, %v552
      %v569 = vsel %vm489, %v363, %v553
      %v570 = vsel %vm490, %v368, %v554
      %v571 = vsel %vm491, %v373, %v555
      %v572 = vsel %vm492, %v378, %v556
      %v573 = vsel %vm493, %v383, %v557
      %v574 = vsel %vm494, %v388, %v558
      %v575 = vsel %vm495, %v393, %v559
      %v576 = vsel %vm496, %v398, %v560
      %v578 = vlaneseq
      %v579 = vshrl.u32 %v578, 7
      %v580 = vsub.s32 0, %v579
      %v581 = vrot.slane %v194, %v580
      %v583 = vmul.f32 %v561, %v581
      %v584 = vmul.f32 %v562, %v581
      %v585 = vmul.f32 %v563, %v581
      %v586 = vmul.f32 %v564, %v581
      %v587 = vmul.f32 %v565, %v581
      %v588 = vmul.f32 %v566, %v581
      %v589 = vmul.f32 %v567, %v581
      %v590 = vmul.f32 %v568, %v581
      %v591 = vmul.f32 %v569, %v581
      %v592 = vmul.f32 %v570, %v581
      %v593 = vmul.f32 %v571, %v581
      %v594 = vmul.f32 %v572, %v581
      %v595 = vmul.f32 %v573, %v581
      %v596 = vmul.f32 %v574, %v581
      %v597 = vmul.f32 %v575, %v581
      %v598 = vmul.f32 %v576, %v581
      %v599 = vsel %vm195, %v583, 0.0
      %600 = vadd.xlane.f32.xlu0 %v599
      %v601 = vpop.xlane.xlu0 %600
      %v602 = vsel %vm195, %v584, 0.0
      %603 = vadd.xlane.f32.xlu0 %v602
      %v604 = vpop.xlane.xlu0 %603
      %v605 = vsel %vm195, %v585, 0.0
      %606 = vadd.xlane.f32.xlu0 %v605
      %v607 = vpop.xlane.xlu0 %606
      %v608 = vsel %vm195, %v586, 0.0
      %609 = vadd.xlane.f32.xlu0 %v608
      %v610 = vpop.xlane.xlu0 %609
      %v611 = vsel %vm195, %v587, 0.0
      %612 = vadd.xlane.f32.xlu0 %v611
      %v613 = vpop.xlane.xlu0 %612
      %v614 = vsel %vm195, %v588, 0.0
      %615 = vadd.xlane.f32.xlu0 %v614
      %v616 = vpop.xlane.xlu0 %615
      %v617 = vsel %vm195, %v589, 0.0
      %618 = vadd.xlane.f32.xlu0 %v617
      %v619 = vpop.xlane.xlu0 %618
      %v620 = vsel %vm195, %v590, 0.0
      %621 = vadd.xlane.f32.xlu0 %v620
      %v622 = vpop.xlane.xlu0 %621
      %v623 = vsel %vm195, %v591, 0.0
      %624 = vadd.xlane.f32.xlu0 %v623
      %v625 = vpop.xlane.xlu0 %624
      %v626 = vsel %vm195, %v592, 0.0
      %627 = vadd.xlane.f32.xlu0 %v626
      %v628 = vpop.xlane.xlu0 %627
      %v629 = vsel %vm195, %v593, 0.0
      %630 = vadd.xlane.f32.xlu0 %v629
      %v631 = vpop.xlane.xlu0 %630
      %v632 = vsel %vm195, %v594, 0.0
      %633 = vadd.xlane.f32.xlu0 %v632
      %v634 = vpop.xlane.xlu0 %633
      %v635 = vsel %vm195, %v595, 0.0
      %636 = vadd.xlane.f32.xlu0 %v635
      %v637 = vpop.xlane.xlu0 %636
      %v638 = vsel %vm195, %v596, 0.0
      %639 = vadd.xlane.f32.xlu0 %v638
      %v640 = vpop.xlane.xlu0 %639
      %v641 = vsel %vm195, %v597, 0.0
      %642 = vadd.xlane.f32.xlu0 %v641
      %v643 = vpop.xlane.xlu0 %642
      %v644 = vsel %vm195, %v598, 0.0
      %645 = vadd.xlane.f32.xlu0 %v644
      %v646 = vpop.xlane.xlu0 %645
      %vm647 = vcmask 7168
      %648 = vst.msk [vmem:[%s172] sm:$0xff] %vm647, %v601
      %649 = vst.msk [vmem:[%s172 + $0x8] sm:$0xff] %vm647, %v604
      %650 = vst.msk [vmem:[%s172 + $0x10] sm:$0xff] %vm647, %v607
      %651 = vst.msk [vmem:[%s172 + $0x18] sm:$0xff] %vm647, %v610
      %652 = vst.msk [vmem:[%s172 + $0x20] sm:$0xff] %vm647, %v613
      %653 = vst.msk [vmem:[%s172 + $0x28] sm:$0xff] %vm647, %v616
      %654 = vst.msk [vmem:[%s172 + $0x30] sm:$0xff] %vm647, %v619
      %655 = vst.msk [vmem:[%s172 + $0x38] sm:$0xff] %vm647, %v622
      %656 = vst.msk [vmem:[%s172 + $0x40] sm:$0xff] %vm647, %v625
      %657 = vst.msk [vmem:[%s172 + $0x48] sm:$0xff] %vm647, %v628
      %658 = vst.msk [vmem:[%s172 + $0x50] sm:$0xff] %vm647, %v631
      %659 = vst.msk [vmem:[%s172 + $0x58] sm:$0xff] %vm647, %v634
      %660 = vst.msk [vmem:[%s172 + $0x60] sm:$0xff] %vm647, %v637
      %661 = vst.msk [vmem:[%s172 + $0x68] sm:$0xff] %vm647, %v640
      %662 = vst.msk [vmem:[%s172 + $0x70] sm:$0xff] %vm647, %v643
      %663 = vst.msk [vmem:[%s172 + $0x78] sm:$0xff] %vm647, %v646
      %s664 = smul.u32 16, %s14
      %p665 = scmp.lt.s32.totalorder %s664, 31
      %s666 = scalar_select %p665, %s664, 31
      %s667 = smul.addr %s666, 8
      %s668 = scalar_lea.vmem %s3, %s667
      // Predicated region
      $region33: #{tpu_custom_call.1} parent=31 // pred_check
        %p669 = pneg %p100
      $region34: #{tpu_custom_call.1} parent=31 // pred_check_branch
        %671 = sbr.rel (%p669) target = $region36
      $region35: #{tpu_custom_call.1} parent=31 // pred_region
        %s672 = smul.u32 16, %s14
      $region36: #{tpu_custom_call.1} parent=31 // pred_fallthru
        _
    $region32: #{tpu_custom_call.1} parent=5 // pred_fallthru
      _
    %p673 = scmp.le.s32.totalorder 2, %s9
    // Predicated region
    $region37: #{tpu_custom_call.1} parent=5 // pred_check
      %p674 = pneg %p673
    $region38: #{tpu_custom_call.1} parent=5 // pred_check_branch
      %676 = sbr.rel (%p674) target = $region40
    $region39: #{tpu_custom_call.1} parent=5 // pred_region
      %s677 = ssub.s32 %s9, 2
      // Predicated region
      $region41: #{tpu_custom_call.1} parent=39 // pred_check
        %p678 = pneg %p106
      $region42: #{tpu_custom_call.1} parent=39 // pred_check_branch
        %680 = sbr.rel (%p678) target = $region44
      $region43: #{tpu_custom_call.1} parent=39 // pred_region
        %s681 = smul.u32 16, %s15
        %p682 = scmp.lt.s32.totalorder %s681, 31
        %s683 = scalar_select %p682, %s681, 31
        %s684 = smul.addr %s683, 8
        %s685 = scalar_lea.vmem %s3, %s684
      $region44: #{tpu_custom_call.1} parent=39 // pred_fallthru
        _
    $region40: #{tpu_custom_call.1} parent=5 // pred_fallthru
      _
  $region6: #{tpu_custom_call.1} parent=0 // loop_footer
    %s13 = sadd.s32 1, %s9
  $region7: #{tpu_custom_call.1} parent=0 // loop_footer_branch
    %8 = sbr.rel target = $region3
  $region8: #{tpu_custom_call.1} parent=0 // loop_exit
    _

</llo_original>
